<compile_context>
chip_gen: v5e
topology: v5e:2x2
jax: 0.10.0
libtpu: 0.0.40
codegen_flags: <defaults>
</compile_context>

<pallas_src>
import jax
import jax.numpy as jnp
from jax.experimental import pallas as pl
from jax.experimental.pallas import tpu as pltpu


def _round_up(x, m):
    return (x + m - 1) // m * m


def _device_kind():
    try:
        return jax.devices()[0].device_kind.lower()
    except Exception:
        return ""


def score_lp_kernel(a_ref, b_ref, l2w_ref, l2b_ref, out_ref):
    a = a_ref[...]                                   # [tp, Fp] (post path, l1 fused)
    b = b_ref[...]                                   # [te, Fp] (emoji path, l1 bias folded)
    tp, fp = a.shape
    te = b.shape[0]

    # relu(l1(cat([k1(post), k2(emoji)]))) without materializing the concat.
    # Single fused expression: when a/b are bf16 (v6e/v7x path) h is built
    # directly in bf16; when a/b are f32 (v5e / exact path) the cast to the
    # matmul operand dtype fuses into the same pass — no second sweep over h.
    h = jax.nn.relu(a[:, None, :] + b[None, :, :]).astype(l2w_ref.dtype)  # [tp,te,Fp]

    # One large MXU matmul with M = tp*te (te is a multiple of 8, so the
    # leading-dim merge is layout-free; Fp stays on the lane axis).
    y = jnp.dot(h.reshape(tp * te, fp), l2w_ref[...],
                preferred_element_type=jnp.float32)
    y = jax.nn.relu(y + l2b_ref[...])                # [tp*te, Op]  (f32)

    out_ref[...] = y.reshape(tp, te, -1).astype(out_ref.dtype)


def score_lp_predicter(post, emoji, params, *, tp=128, te=128,
                       use_bf16=True, out_dtype=jnp.float32):
    P, F = post.shape
    E, _ = emoji.shape
    out_feat = params['l2_w'].shape[0]
    f32 = jnp.float32
    kind = _device_kind()
    is_v7x = "v7" in kind
    # v5e/v5p have no bf16 VALU: keep the broadcast-add/relu in f32 there and
    # only cast the matmul operand (fused in-kernel).  v6e/v7x: full bf16 h.
    compute_bf16 = use_bf16 and ("v5" not in kind)

    # ---- wrapper-side exact weight fusion (PyTorch Linear: y = x @ W.T + b) ----
    k1wT = params['k1_w'].T.astype(f32)              # [F, F]
    k2wT = params['k2_w'].T.astype(f32)              # [F, F]
    l1wT = params['l1_w'].T.astype(f32)              # [2F, F]
    l1wa, l1wb = l1wT[:F], l1wT[F:]                  # post half / emoji half
    a = post.astype(f32) @ (k1wT @ l1wa) + params['k1_b'].astype(f32) @ l1wa
    b = (emoji.astype(f32) @ (k2wT @ l1wb)
         + params['k2_b'].astype(f32) @ l1wb
         + params['l1_b'].astype(f32))

    # ---- padding: lane-dense feature/output axes, tile-aligned row counts ----
    Fp = _round_up(F, 128)                           # zero cols -> exact (relu(0)=0, zero l2 rows)
    Op = _round_up(out_feat, 128)                    # unmasked lane-dense output stores
    tp_eff = min(_round_up(tp, 8), _round_up(P, 8))
    te_eff = min(_round_up(te, 8), _round_up(E, 8))
    Pp = _round_up(P, tp_eff)
    Ep = _round_up(E, te_eff)

    a = jnp.pad(a, ((0, Pp - P), (0, Fp - F)))
    b = jnp.pad(b, ((0, Ep - E), (0, Fp - F)))
    l2w = jnp.pad(params['l2_w'].T.astype(f32), ((0, Fp - F), (0, Op - out_feat)))
    l2b = jnp.pad(params['l2_b'].astype(f32), (0, Op - out_feat)).reshape(1, Op)
    if use_bf16:
        l2w = l2w.astype(jnp.bfloat16)               # bf16 MXU operands, f32 accumulation
    if compute_bf16:
        a = a.astype(jnp.bfloat16)                   # h built directly in bf16 (v6e/v7x)
        b = b.astype(jnp.bfloat16)

    grid = (Pp // tp_eff, Ep // te_eff)
    const = lambda i, j: (0, 0)
    out_bytes = Pp * Ep * Op * jnp.dtype(out_dtype).itemsize
    cost = pl.CostEstimate(
        flops=int(2 * Pp * Ep * Fp * Op + 2 * Pp * Ep * Fp),
        transcendentals=0,
        bytes_accessed=int(a.size * a.dtype.itemsize + b.size * b.dtype.itemsize
                           + l2w.size * l2w.dtype.itemsize + out_bytes),
    )

    out = pl.pallas_call(
        score_lp_kernel,
        out_shape=jax.ShapeDtypeStruct((Pp, Ep, Op), out_dtype),
        grid=grid,
        in_specs=[
            pl.BlockSpec((tp_eff, Fp), lambda i, j: (i, 0)),   # a tile (post rows)
            pl.BlockSpec((te_eff, Fp), lambda i, j: (j, 0)),   # b tile (emoji rows)
            pl.BlockSpec((Fp, Op), const),                     # fused l2 W^T (constant)
            pl.BlockSpec((1, Op), const),                      # l2 bias (constant)
        ],
        out_specs=pl.BlockSpec((tp_eff, te_eff, Op), lambda i, j: (i, j, 0)),
        compiler_params=pltpu.CompilerParams(
            dimension_semantics=("parallel", "parallel"),      # megacore on v7x
            # 48 MiB fits v7x's 64 MiB physical VMEM; 96 MiB on 128 MiB parts.
            vmem_limit_bytes=(48 if is_v7x else 96) * 1024 * 1024,
        ),
        cost_estimate=cost,
    )(a, b, l2w, l2b)

    # Skip the full HBM->HBM slice copy when no padding was applied.
    if Pp == P and Ep == E and Op == out_feat:
        return out
    return out[:P, :E, :out_feat]


def reference_forward(post, emoji, params):
    """Plain-JAX mirror of the PyTorch forward (for verification)."""
    P, E = post.shape[0], emoji.shape[0]
    ph = post @ params['k1_w'].T + params['k1_b']
    eh = emoji @ params['k2_w'].T + params['k2_b']
    pt = jnp.tile(ph[:, None, :], (1, E, 1))
    et = jnp.tile(eh[None, :, :], (P, 1, 1))
    x = jnp.concatenate([pt, et], axis=-1)
    x = jax.nn.relu(x @ params['l1_w'].T + params['l1_b'])
    x = jax.nn.relu(x @ params['l2_w'].T + params['l2_b'])
    return x


def init_params(key, in_feat, out_feat):
    ks = jax.random.split(key, 8)
    s = 1.0 / jnp.sqrt(in_feat)
    s2 = 1.0 / jnp.sqrt(2 * in_feat)
    return {
        'k1_w': jax.random.uniform(ks[0], (in_feat, in_feat), jnp.float32, -s, s),
        'k1_b': jax.random.uniform(ks[1], (in_feat,), jnp.float32, -s, s),
        'k2_w': jax.random.uniform(ks[2], (in_feat, in_feat), jnp.float32, -s, s),
        'k2_b': jax.random.uniform(ks[3], (in_feat,), jnp.float32, -s, s),
        'l1_w': jax.random.uniform(ks[4], (in_feat, 2 * in_feat), jnp.float32, -s2, s2),
        'l1_b': jax.random.uniform(ks[5], (in_feat,), jnp.float32, -s2, s2),
        'l2_w': jax.random.uniform(ks[6], (out_feat, in_feat), jnp.float32, -s, s),
        'l2_b': jax.random.uniform(ks[7], (out_feat,), jnp.float32, -s, s),
    }


if __name__ == "__main__":
    in_feat, out_feat = 32, 128
    key = jax.random.PRNGKey(0)
    kpost1, kemoji1, kparams, kpost2, kemoji2 = jax.random.split(key, 5)
    params = init_params(kparams, in_feat, out_feat)

    # Case 1: small aligned shapes (single grid step, no output slice), exact f32.
    P1, E1 = 16, 8
    post1 = jax.random.normal(kpost1, (P1, in_feat), jnp.float32)
    emoji1 = jax.random.normal(kemoji1, (E1, in_feat), jnp.float32)
    out1 = jax.block_until_ready(
        score_lp_predicter(post1, emoji1, params, use_bf16=False))
    ref1 = reference_forward(post1, emoji1, params)
    assert out1.shape == (P1, E1, out_feat)
    assert jnp.allclose(out1, ref1, atol=1e-4, rtol=1e-4), "mismatch vs reference (case 1)"

    # Case 2: ragged sizes + multi-block grid (exercises padding/slicing), f32.
    P2, E2 = 40, 24
    post2 = jax.random.normal(kpost2, (P2, in_feat), jnp.float32)
    emoji2 = jax.random.normal(kemoji2, (E2, in_feat), jnp.float32)
    out2 = jax.block_until_ready(
        score_lp_predicter(post2, emoji2, params, tp=16, te=8, use_bf16=False))
    ref2 = reference_forward(post2, emoji2, params)
    assert out2.shape == (P2, E2, out_feat)
    assert jnp.allclose(out2, ref2, atol=1e-4, rtol=1e-4), "mismatch vs reference (case 2)"

    # Case 3: bf16 compute path (perf default) — looser tolerance.
    out3 = jax.block_until_ready(
        score_lp_predicter(post2, emoji2, params, tp=16, te=8, use_bf16=True))
    assert jnp.allclose(out3, ref2, atol=5e-2, rtol=5e-2), "mismatch vs reference (bf16 path)"

    # Case 4: bf16 compute + bf16 output (halves HBM writeback) — looser tolerance.
    out4 = jax.block_until_ready(
        score_lp_predicter(post2, emoji2, params, tp=16, te=8,
                           use_bf16=True, out_dtype=jnp.bfloat16))
    assert out4.dtype == jnp.bfloat16
    assert jnp.allclose(out4.astype(jnp.float32), ref2, atol=8e-2, rtol=8e-2), \
        "mismatch vs reference (bf16 output path)"

    # TODO(synk): apply_edges / graph_forward (DGL graph plumbing) are not
    # translated; only the dense pairwise forward() is implemented.
    print("KERNEL_OK")
</pallas_src>

<mosaic_0001>
module attributes {stable_mosaic.version = 11 : i64} {
  func.func @score_lp_kernel(%arg0: i32, %arg1: i32, %arg2: memref<16x128xf32, #tpu.memory_space<vmem>>, %arg3: memref<8x128xf32, #tpu.memory_space<vmem>>, %arg4: memref<128x128xf32, #tpu.memory_space<vmem>>, %arg5: memref<1x128xf32, #tpu.memory_space<vmem>>, %arg6: memref<16x8x128xf32, #tpu.memory_space<vmem>>) attributes {dimension_semantics = [#tpu.dimension_semantics<parallel>, #tpu.dimension_semantics<parallel>], iteration_bounds = array<i64: 1, 1>, scalar_prefetch = 0 : i64, scratch_operands = 0 : i64, tpu.core_type = #tpu.core_type<tc>, window_params = [{transform_indices = @transform_0, window_bounds = array<i64: 16, 128>}, {transform_indices = @transform_1, window_bounds = array<i64: 8, 128>}, {pipeline_mode = #tpu.pipeline_mode<synchronous>, transform_indices = @transform_2, window_bounds = array<i64: 128, 128>}, {pipeline_mode = #tpu.pipeline_mode<synchronous>, transform_indices = @transform_3, window_bounds = array<i64: 1, 128>}, {transform_indices = @transform_4, window_bounds = array<i64: 16, 8, 128>}]} {
    %c0 = arith.constant 0 : index
    %c0_0 = arith.constant 0 : index
    %0 = vector.load %arg2[%c0, %c0_0] : memref<16x128xf32, #tpu.memory_space<vmem>>, vector<16x128xf32>
    %c0_1 = arith.constant 0 : index
    %c0_2 = arith.constant 0 : index
    %1 = vector.load %arg3[%c0_1, %c0_2] : memref<8x128xf32, #tpu.memory_space<vmem>>, vector<8x128xf32>
    %2 = vector.shape_cast %0 : vector<16x128xf32> to vector<16x1x128xf32>
    %3 = vector.shape_cast %1 : vector<8x128xf32> to vector<1x8x128xf32>
    %4 = vector.broadcast %2 : vector<16x1x128xf32> to vector<16x8x128xf32>
    %5 = vector.broadcast %3 : vector<1x8x128xf32> to vector<16x8x128xf32>
    %6 = arith.addf %4, %5 : vector<16x8x128xf32>
    %cst = arith.constant 0.000000e+00 : f32
    %7 = vector.broadcast %cst : f32 to vector<16x8x128xf32>
    %8 = arith.maximumf %6, %7 : vector<16x8x128xf32>
    %9 = vector.shape_cast %8 : vector<16x8x128xf32> to vector<128x128xf32>
    %c0_3 = arith.constant 0 : index
    %c0_4 = arith.constant 0 : index
    %10 = vector.load %arg4[%c0_3, %c0_4] : memref<128x128xf32, #tpu.memory_space<vmem>>, vector<128x128xf32>
    %cst_5 = arith.constant dense<0.000000e+00> : vector<128x128xf32>
    %11 = tpu.matmul %9, %10, %cst_5 {dimension_numbers = #tpu.dot_dimension_numbers<[1], [0], [0], [1], [0, 0, 1, 1], [], []>} : vector<128x128xf32>, vector<128x128xf32>, vector<128x128xf32> -> vector<128x128xf32>
    %c0_6 = arith.constant 0 : index
    %c0_7 = arith.constant 0 : index
    %12 = vector.load %arg5[%c0_6, %c0_7] : memref<1x128xf32, #tpu.memory_space<vmem>>, vector<1x128xf32>
    %13 = vector.broadcast %12 : vector<1x128xf32> to vector<128x128xf32>
    %14 = arith.addf %11, %13 : vector<128x128xf32>
    %cst_8 = arith.constant 0.000000e+00 : f32
    %15 = vector.broadcast %cst_8 : f32 to vector<128x128xf32>
    %16 = arith.maximumf %14, %15 : vector<128x128xf32>
    %17 = vector.shape_cast %16 : vector<128x128xf32> to vector<16x8x128xf32>
    %c0_9 = arith.constant 0 : index
    %c0_10 = arith.constant 0 : index
    %c0_11 = arith.constant 0 : index
    %18 = vector.load %arg6[%c0_9, %c0_10, %c0_11] : memref<16x8x128xf32, #tpu.memory_space<vmem>>, vector<16x8x128xf32>
    tpu.vector_store %arg6[%c0_9, %c0_10, %c0_11], %17 {strides = array<i32>} : memref<16x8x128xf32, #tpu.memory_space<vmem>>, vector<16x8x128xf32>,
    return
  }
  func.func @transform_0(%arg0: i32, %arg1: i32) -> (i32, i32) {
    %c0_i32 = arith.constant 0 : i32
    %c0_i32_0 = arith.constant 0 : i32
    return %arg0, %c0_i32 : i32, i32
  }
  func.func @transform_1(%arg0: i32, %arg1: i32) -> (i32, i32) {
    %c0_i32 = arith.constant 0 : i32
    %c0_i32_0 = arith.constant 0 : i32
    return %arg1, %c0_i32 : i32, i32
  }
  func.func @transform_2(%arg0: i32, %arg1: i32) -> (i32, i32) {
    %c0_i32 = arith.constant 0 : i32
    %c0_i32_0 = arith.constant 0 : i32
    %c0_i32_1 = arith.constant 0 : i32
    return %c0_i32, %c0_i32_0 : i32, i32
  }
  func.func @transform_3(%arg0: i32, %arg1: i32) -> (i32, i32) {
    %c0_i32 = arith.constant 0 : i32
    %c0_i32_0 = arith.constant 0 : i32
    %c0_i32_1 = arith.constant 0 : i32
    return %c0_i32, %c0_i32_0 : i32, i32
  }
  func.func @transform_4(%arg0: i32, %arg1: i32) -> (i32, i32, i32) {
    %c0_i32 = arith.constant 0 : i32
    %c0_i32_0 = arith.constant 0 : i32
    return %arg0, %arg1, %c0_i32 : i32, i32, i32
  }
}

</mosaic_0001>

<llo_original>
// kernel: tpu_custom_call.1
$region0: #{tpu_custom_call.1}
  #allocation0 [shape = 'u32[]', space=smem, size = 0x4, offset = 0x4, fixed_abs, tag = 'smem constant byte address 0x4 - core index']
  #allocation1 [shape = 'u32[72,128]{1,0:T(1,128)}', space=vmem, size = 0x9000, scoped, tag = 'internal scratch']
  %s0 = inlined_call_operand.hbm [shape: f32[16,128], index: 0, kind: input, shape index: {}]
  %s1 = inlined_call_operand.hbm [shape: f32[8,128], index: 1, kind: input, shape index: {}]
  %s2 = inlined_call_operand.hbm [shape: f32[128,128], index: 2, kind: input, shape index: {}]
  %s3 = inlined_call_operand.vmem [shape: f32[1,128], index: 3, kind: input, shape index: {}]
  %s4 = inlined_call_operand.hbm [shape: f32[16,8,128], index: 4, kind: output, shape index: {}]
  %s5 = sld [smem:[#allocation0]]
  $region38: #{tpu_custom_call.1} parent=0
    _
  %s7 = ssub.s32 1, %s5
  %s8 = scalar_select 0, %s7, %s5
  $region1: #{tpu_custom_call.1} parent=0
    #allocation2 [shape = 'u8[8192]{0}', space=vmem, size = 0x2000, scoped, tag = 'input window, operand 0, single buffered']
    #allocation3 [shape = 's32[1]{0}', space=sflag, size = 0x4, scoped, tag = 'scoped memory for tpu_custom_call.1']
    #allocation4 [shape = 's32[1]{0}', space=sflag, size = 0x4, scoped, tag = 'scoped memory for tpu_custom_call.1']
    #allocation5 [shape = 'u8[4096]{0}', space=vmem, size = 0x1000, scoped, tag = 'input window, operand 1, single buffered']
    #allocation6 [shape = 's32[1]{0}', space=sflag, size = 0x4, scoped, tag = 'scoped memory for tpu_custom_call.1']
    #allocation7 [shape = 'u8[65536]{0}', space=vmem, size = 0x10000, scoped, tag = 'input window, operand 2, single buffered']
    #allocation8 [shape = 'u8[65536]{0}', space=vmem, size = 0x10000, scoped, tag = 'output window, operand 0, single buffered']
    %9 = vsyncpa [#allocation3], 0
    %10 = vsyncpa [#allocation6], 0
    %11 = vsyncpa [#allocation4], 0
    // Predicated region
    $region2: #{tpu_custom_call.1} parent=1 // pred_check
      _
    $region3: #{tpu_custom_call.1} parent=1 // pred_check_branch
      %13 = sbr.rel (0) target = $region5
    $region4: #{tpu_custom_call.1} parent=1 // pred_region
      %15 = vsyncadd [#allocation3], 0
      %s16 = sshll.u32 %s0, 4
      %s17 = int_to_ptr.hbm [resolvable:$true] %s16
      %s18 = sshll.u32 [#allocation2], 4
      %s19 = int_to_ptr.vmem [resolvable:$true] %s18
      %24 = dma.hbm_to_vmem [thread:$0]  %s17, 256, %s19, [#allocation3], 128, 128, 8
    $region5: #{tpu_custom_call.1} parent=1 // pred_fallthru
      _
    // Predicated region
    $region6: #{tpu_custom_call.1} parent=1 // pred_check
      _
    $region7: #{tpu_custom_call.1} parent=1 // pred_check_branch
      %26 = sbr.rel (0) target = $region9
    $region8: #{tpu_custom_call.1} parent=1 // pred_region
      %28 = vsyncadd [#allocation6], 0
      %s30 = sshll.u32 %s1, 4
      %s31 = int_to_ptr.hbm [resolvable:$true] %s30
      %s32 = sshll.u32 [#allocation5], 4
      %s33 = int_to_ptr.vmem [resolvable:$true] %s32
      %35 = dma.hbm_to_vmem [thread:$0]  %s31, 128, %s33, [#allocation6]
    $region9: #{tpu_custom_call.1} parent=1 // pred_fallthru
      _
    // Predicated region
    $region10: #{tpu_custom_call.1} parent=1 // pred_check
      _
    $region11: #{tpu_custom_call.1} parent=1 // pred_check_branch
      %37 = sbr.rel (0) target = $region13
    $region12: #{tpu_custom_call.1} parent=1 // pred_region
      %39 = vsyncadd [#allocation6], 0
      %s40 = sshll.u32 %s2, 4
      %s41 = int_to_ptr.hbm [resolvable:$true] %s40
      %s42 = sshll.u32 [#allocation7], 4
      %s43 = int_to_ptr.vmem [resolvable:$true] %s42
      %48 = dma.hbm_to_vmem [thread:$0]  %s41, 2048, %s43, [#allocation6], 128, 128, 8
    $region13: #{tpu_custom_call.1} parent=1 // pred_fallthru
      _
    // Predicated region
    $region14: #{tpu_custom_call.1} parent=1 // pred_check
      _
    $region15: #{tpu_custom_call.1} parent=1 // pred_check_branch
      %50 = sbr.rel (0) target = $region17
    $region16: #{tpu_custom_call.1} parent=1 // pred_region
      _
    $region17: #{tpu_custom_call.1} parent=1 // pred_fallthru
      _
    // Predicated region
    $region18: #{tpu_custom_call.1} parent=1 // pred_check
      _
    $region19: #{tpu_custom_call.1} parent=1 // pred_check_branch
      %52 = sbr.rel (0) target = $region21
    $region20: #{tpu_custom_call.1} parent=1 // pred_region
      %54 = dma.done [#allocation3], 256
    $region21: #{tpu_custom_call.1} parent=1 // pred_fallthru
      _
    // Predicated region
    $region22: #{tpu_custom_call.1} parent=1 // pred_check
      _
    $region23: #{tpu_custom_call.1} parent=1 // pred_check_branch
      %56 = sbr.rel (0) target = $region25
    $region24: #{tpu_custom_call.1} parent=1 // pred_region
      %58 = dma.done [#allocation6], 128
    $region25: #{tpu_custom_call.1} parent=1 // pred_fallthru
      _
    // Predicated region
    $region26: #{tpu_custom_call.1} parent=1 // pred_check
      _
    $region27: #{tpu_custom_call.1} parent=1 // pred_check_branch
      %60 = sbr.rel (0) target = $region29
    $region28: #{tpu_custom_call.1} parent=1 // pred_region
      %62 = dma.done [#allocation6], 2048
    $region29: #{tpu_custom_call.1} parent=1 // pred_fallthru
      _
    %v63 = vld [vmem:[#allocation2] sm:$0xff]
    %v64 = vld [vmem:[#allocation2 + $0x8] sm:$0xff]
    %v65 = vld [vmem:[#allocation5] sm:$0xff]
    %v68 = vrot.slane %v63, 1
    %v69 = vrot.slane %v63, 2
    %v70 = vrot.slane %v63, 3
    %v71 = vrot.slane %v63, 4
    %v72 = vrot.slane %v63, 5
    %v73 = vrot.slane %v63, 6
    %v74 = vrot.slane %v63, 7
    %v75 = vrot.slane %v64, 1
    %v76 = vrot.slane %v64, 2
    %v77 = vrot.slane %v64, 3
    %v78 = vrot.slane %v64, 4
    %v79 = vrot.slane %v64, 5
    %v80 = vrot.slane %v64, 6
    %v81 = vrot.slane %v64, 7
    %v82 = vperm.slane %v63, 0
    %v83 = vperm.slane %v68, 0
    %v84 = vperm.slane %v69, 0
    %v85 = vperm.slane %v70, 0
    %v86 = vperm.slane %v71, 0
    %v87 = vperm.slane %v72, 0
    %v88 = vperm.slane %v73, 0
    %v89 = vperm.slane %v74, 0
    %v90 = vperm.slane %v64, 0
    %v91 = vperm.slane %v75, 0
    %v92 = vperm.slane %v76, 0
    %v93 = vperm.slane %v77, 0
    %v94 = vperm.slane %v78, 0
    %v95 = vperm.slane %v79, 0
    %v96 = vperm.slane %v80, 0
    %v97 = vperm.slane %v81, 0
    %v114 = vadd.f32 %v82, %v65
    %v115 = vadd.f32 %v83, %v65
    %v116 = vadd.f32 %v84, %v65
    %v117 = vadd.f32 %v85, %v65
    %v118 = vadd.f32 %v86, %v65
    %v119 = vadd.f32 %v87, %v65
    %v120 = vadd.f32 %v88, %v65
    %v121 = vadd.f32 %v89, %v65
    %v122 = vadd.f32 %v90, %v65
    %v123 = vadd.f32 %v91, %v65
    %v124 = vadd.f32 %v92, %v65
    %v125 = vadd.f32 %v93, %v65
    %v126 = vadd.f32 %v94, %v65
    %v127 = vadd.f32 %v95, %v65
    %v128 = vadd.f32 %v96, %v65
    %v129 = vadd.f32 %v97, %v65
    %v130 = vmax.f32 %v114, 0.0
    %v131 = vmax.f32 %v115, 0.0
    %v132 = vmax.f32 %v116, 0.0
    %v133 = vmax.f32 %v117, 0.0
    %v134 = vmax.f32 %v118, 0.0
    %v135 = vmax.f32 %v119, 0.0
    %v136 = vmax.f32 %v120, 0.0
    %v137 = vmax.f32 %v121, 0.0
    %v138 = vmax.f32 %v122, 0.0
    %v139 = vmax.f32 %v123, 0.0
    %v140 = vmax.f32 %v124, 0.0
    %v141 = vmax.f32 %v125, 0.0
    %v142 = vmax.f32 %v126, 0.0
    %v143 = vmax.f32 %v127, 0.0
    %v144 = vmax.f32 %v128, 0.0
    %v145 = vmax.f32 %v129, 0.0
    %v146 = vld [vmem:[#allocation7] sm:$0xff]
    %v147 = vld [vmem:[#allocation7 + $0x8] sm:$0xff]
    %v148 = vld [vmem:[#allocation7 + $0x10] sm:$0xff]
    %v149 = vld [vmem:[#allocation7 + $0x18] sm:$0xff]
    %v150 = vld [vmem:[#allocation7 + $0x20] sm:$0xff]
    %v151 = vld [vmem:[#allocation7 + $0x28] sm:$0xff]
    %v152 = vld [vmem:[#allocation7 + $0x30] sm:$0xff]
    %v153 = vld [vmem:[#allocation7 + $0x38] sm:$0xff]
    %v154 = vld [vmem:[#allocation7 + $0x40] sm:$0xff]
    %v155 = vld [vmem:[#allocation7 + $0x48] sm:$0xff]
    %v156 = vld [vmem:[#allocation7 + $0x50] sm:$0xff]
    %v157 = vld [vmem:[#allocation7 + $0x58] sm:$0xff]
    %v158 = vld [vmem:[#allocation7 + $0x60] sm:$0xff]
    %v159 = vld [vmem:[#allocation7 + $0x68] sm:$0xff]
    %v160 = vld [vmem:[#allocation7 + $0x70] sm:$0xff]
    %v161 = vld [vmem:[#allocation7 + $0x78] sm:$0xff]
    %v162 = vld [vmem:[%s3] sm:$0x1]
    %v164 = vperm.slane %v162, 0
    %166 = vmatpush.msra.mxu0 %v161
    %167 = vmatpush.msra.mxu0 %v160
    %168 = vmatpush.msra.mxu0 %v159
    %169 = vmatpush.msra.mxu0 %v158
    %170 = vmatpush.msra.mxu0 %v157
    %171 = vmatpush.msra.mxu0 %v156
    %172 = vmatpush.msra.mxu0 %v155
    %173 = vmatpush.msra.mxu0 %v154
    %174 = vmatpush.msra.mxu0 %v153
    %175 = vmatpush.msra.mxu0 %v152
    %176 = vmatpush.msra.mxu0 %v151
    %177 = vmatpush.msra.mxu0 %v150
    %178 = vmatpush.msra.mxu0 %v149
    %179 = vmatpush.msra.mxu0 %v148
    %180 = vmatpush.msra.mxu0 %v147
    %181 = vmatpush.msra.mxu0 %v146
    %182 = vmatmul.f32.gmra.mxu0 %v130
    %v183 = vpop.f32.mrf.mxu0
    %v184 = vadd.f32 %v164, %v183
    %185 = vmatmul.f32.gmra.mxu0 %v131
    %v186 = vpop.f32.mrf.mxu0
    %v187 = vadd.f32 %v164, %v186
    %188 = vmatmul.f32.gmra.mxu0 %v132
    %v189 = vpop.f32.mrf.mxu0
    %v190 = vadd.f32 %v164, %v189
    %191 = vmatmul.f32.gmra.mxu0 %v133
    %v192 = vpop.f32.mrf.mxu0
    %v193 = vadd.f32 %v164, %v192
    %194 = vmatmul.f32.gmra.mxu0 %v134
    %v195 = vpop.f32.mrf.mxu0
    %v196 = vadd.f32 %v164, %v195
    %197 = vmatmul.f32.gmra.mxu0 %v135
    %v198 = vpop.f32.mrf.mxu0
    %v199 = vadd.f32 %v164, %v198
    %200 = vmatmul.f32.gmra.mxu0 %v136
    %v201 = vpop.f32.mrf.mxu0
    %v202 = vadd.f32 %v164, %v201
    %203 = vmatmul.f32.gmra.mxu0 %v137
    %v204 = vpop.f32.mrf.mxu0
    %v205 = vadd.f32 %v164, %v204
    %206 = vmatmul.f32.gmra.mxu0 %v138
    %v207 = vpop.f32.mrf.mxu0
    %v208 = vadd.f32 %v164, %v207
    %209 = vmatmul.f32.gmra.mxu0 %v139
    %v210 = vpop.f32.mrf.mxu0
    %v211 = vadd.f32 %v164, %v210
    %212 = vmatmul.f32.gmra.mxu0 %v140
    %v213 = vpop.f32.mrf.mxu0
    %v214 = vadd.f32 %v164, %v213
    %215 = vmatmul.f32.gmra.mxu0 %v141
    %v216 = vpop.f32.mrf.mxu0
    %v217 = vadd.f32 %v164, %v216
    %218 = vmatmul.f32.gmra.mxu0 %v142
    %v219 = vpop.f32.mrf.mxu0
    %v220 = vadd.f32 %v164, %v219
    %221 = vmatmul.f32.gmra.mxu0 %v143
    %v222 = vpop.f32.mrf.mxu0
    %v223 = vadd.f32 %v164, %v222
    %224 = vmatmul.f32.gmra.mxu0 %v144
    %v225 = vpop.f32.mrf.mxu0
    %v226 = vadd.f32 %v164, %v225
    %227 = vmatmul.f32.gmra.mxu0 %v145
    %v228 = vpop.f32.mrf.mxu0
    %v229 = vadd.f32 %v164, %v228
    %230 = vdwg.mxu0
    %v231 = vmax.f32 %v184, 0.0
    %v232 = vmax.f32 %v187, 0.0
    %v233 = vmax.f32 %v190, 0.0
    %v234 = vmax.f32 %v193, 0.0
    %v235 = vmax.f32 %v196, 0.0
    %v236 = vmax.f32 %v199, 0.0
    %v237 = vmax.f32 %v202, 0.0
    %v238 = vmax.f32 %v205, 0.0
    %v239 = vmax.f32 %v208, 0.0
    %v240 = vmax.f32 %v211, 0.0
    %v241 = vmax.f32 %v214, 0.0
    %v242 = vmax.f32 %v217, 0.0
    %v243 = vmax.f32 %v220, 0.0
    %v244 = vmax.f32 %v223, 0.0
    %v245 = vmax.f32 %v226, 0.0
    %v246 = vmax.f32 %v229, 0.0
    %247 = vst [vmem:[#allocation8] sm:$0xff] %v231
    %248 = vst [vmem:[#allocation8 + $0x8] sm:$0xff] %v232
    %249 = vst [vmem:[#allocation8 + $0x10] sm:$0xff] %v233
    %250 = vst [vmem:[#allocation8 + $0x18] sm:$0xff] %v234
    %251 = vst [vmem:[#allocation8 + $0x20] sm:$0xff] %v235
    %252 = vst [vmem:[#allocation8 + $0x28] sm:$0xff] %v236
    %253 = vst [vmem:[#allocation8 + $0x30] sm:$0xff] %v237
    %254 = vst [vmem:[#allocation8 + $0x38] sm:$0xff] %v238
    %255 = vst [vmem:[#allocation8 + $0x40] sm:$0xff] %v239
    %256 = vst [vmem:[#allocation8 + $0x48] sm:$0xff] %v240
    %257 = vst [vmem:[#allocation8 + $0x50] sm:$0xff] %v241
    %258 = vst [vmem:[#allocation8 + $0x58] sm:$0xff] %v242
    %259 = vst [vmem:[#allocation8 + $0x60] sm:$0xff] %v243
    %260 = vst [vmem:[#allocation8 + $0x68] sm:$0xff] %v244
    %261 = vst [vmem:[#allocation8 + $0x70] sm:$0xff] %v245
    %262 = vst [vmem:[#allocation8 + $0x78] sm:$0xff] %v246
    // Predicated region
    $region30: #{tpu_custom_call.1} parent=1 // pred_check
      _
    $region31: #{tpu_custom_call.1} parent=1 // pred_check_branch
      %264 = sbr.rel (0) target = $region33
    $region32: #{tpu_custom_call.1} parent=1 // pred_region
      %266 = vsyncadd [#allocation4], 0
      %s267 = sshll.u32 [#allocation8], 4
      %s268 = int_to_ptr.vmem [resolvable:$true] %s267
      %s269 = sshll.u32 %s4, 4
      %s270 = int_to_ptr.hbm [resolvable:$true] %s269
      %275 = dma.vmem_to_hbm [thread:$0]  %s268, 2048, %s270, [#allocation4], 128, 128, 8
    $region33: #{tpu_custom_call.1} parent=1 // pred_fallthru
      _
    // Predicated region
    $region34: #{tpu_custom_call.1} parent=1 // pred_check
      _
    $region35: #{tpu_custom_call.1} parent=1 // pred_check_branch
      %277 = sbr.rel (0) target = $region37
    $region36: #{tpu_custom_call.1} parent=1 // pred_region
      %279 = dma.done [#allocation4], 2048
    $region37: #{tpu_custom_call.1} parent=1 // pred_fallthru
      _
    %280 = vsyncpa [#allocation3], 1
    %281 = vsyncpa [#allocation6], 1
    %282 = vsyncpa [#allocation4], 1

</llo_original>
